<compile_context>
chip_gen: v5e
topology: v5e:2x2
jax: 0.10.0
libtpu: 0.0.40
codegen_flags: <defaults>
</compile_context>

<pallas_src>
import jax
import jax.numpy as jnp
from jax import lax
from jax.experimental import pallas as pl
from jax.experimental.pallas import tpu as pltpu


def _lstm_last_kernel(ft_ref, hist_ref, wih_ref, whh_ref, b_ref, out_ref,
                      xg_ref):
    """Fused input projection + serial LSTM recurrence; emits the final h.

    ft_ref   : (Bt, 1)      int32  VMEM  per-row first valid timestep
    hist_ref : (T, Bt, Dp)  f32    VMEM  raw history tile (time-major)
    wih_ref  : (Dp, 4H)     f32    VMEM  input->gate weights (i/f/o cols * 0.5)
    whh_ref  : (H, 4H)      f32    VMEM  hidden->gate weights (i/f/o cols * 0.5)
    b_ref    : (1, 4H)      f32    VMEM  bias (i/f/o cols * 0.5)
    out_ref  : (Bt, H)      f32    VMEM  selected last outputs
    xg_ref   : (T, Bt, 4H)  f32    VMEM scratch  pre-gated inputs
    """
    T, Bt, _ = hist_ref.shape
    H = out_ref.shape[1]
    G = whh_ref.shape[1]

    # ---- Prologue: fused input projection (MXU), off the serial chain.
    w_ih = wih_ref[...]                               # (Dp, 4H)
    bias = b_ref[...]                                 # (1, 4H)
    for t in range(T):                                # tiny matmuls, prologue only
        xg_ref[t] = jnp.dot(hist_ref[t], w_ih,
                            preferred_element_type=jnp.float32) + bias

    # ---- Loop-invariant values hoisted out of the recurrence.
    w_hh = whh_ref[...]                               # (H, 4H), column-scaled
    ft_b = jnp.broadcast_to(ft_ref[...], (Bt, H))     # (Bt, H) int32, hoisted
    # alpha/beta are compile-time constants built in-kernel (no VMEM inputs):
    # i,f,o columns -> 0.5*tanh(.)+0.5 (== sigmoid, pre-scaled inputs);
    # g columns     -> 1.0*tanh(.)+0.0.
    col = lax.broadcasted_iota(jnp.int32, (Bt, G), 1)
    is_g = (col >= 2 * H) & (col < 3 * H)
    alpha = jnp.where(is_g, 1.0, 0.5).astype(jnp.float32)
    beta = jnp.where(is_g, 0.0, 0.5).astype(jnp.float32)

    h = jnp.zeros((Bt, H), jnp.float32)
    c = jnp.zeros((Bt, H), jnp.float32)

    # ---- Serial recurrence, fully unrolled (T small & static): per step one
    # tiny (Bt,H)x(H,4H) MXU matmul, one full-vreg tanh, one small tanh,
    # compare + selects.  xg_ref[t] loads are lane-dense and hoistable.
    for t in range(T):
        gates = xg_ref[t] + jnp.dot(h, w_hh, preferred_element_type=jnp.float32)
        act = alpha * jnp.tanh(gates) + beta          # i,f,o -> sigmoid; g -> tanh
        i_g = act[:, 0 * H:1 * H]
        f_g = act[:, 1 * H:2 * H]
        g_g = act[:, 2 * H:3 * H]
        o_g = act[:, 3 * H:4 * H]
        c_new = f_g * c + i_g * g_g
        h_new = o_g * jnp.tanh(c_new)
        # Rows whose sequence has not started keep the zero initial state
        # (equivalent to pack_sequence starting row i at first_timesteps[i]).
        started = t >= ft_b                           # VPU compare only
        h = jnp.where(started, h_new, h)
        c = jnp.where(started, c_new, c)

    out_ref[...] = h                                  # single store, after loop


def node_history_encoder_forward(history, first_timesteps, params, *,
                                 block_b=128):
    """history: (B, T, D) f32, first_timesteps: (B,) int -> (B, H) f32."""
    B, T, D = history.shape
    H = params["w_hh"].shape[0]
    G = 4 * H

    ft = first_timesteps.astype(jnp.int32)

    # Row tile: 128 for production batches (fills MXU rows, amortizes the
    # ~0.35us per-grid-step overhead, >=2 blocks for v7x's two TensorCores once
    # B > block_b), clamped to the 8-aligned batch for small test shapes.
    Bp8 = ((B + 7) // 8) * 8
    block_b = max(8, min(block_b, Bp8))
    Bp = ((B + block_b - 1) // block_b) * block_b
    if Bp != B:
        history = jnp.pad(history, ((0, Bp - B), (0, 0), (0, 0)))
        ft = jnp.pad(ft, (0, Bp - B), constant_values=T)  # padded rows never start

    # Pad the feature dim to a sublane multiple so the fused in-kernel
    # projection contracts over an aligned K (zero rows contribute nothing).
    Dp = ((D + 7) // 8) * 8
    w_ih = params["w_ih"]
    if Dp != D:
        history = jnp.pad(history, ((0, 0), (0, 0), (0, Dp - D)))
        w_ih = jnp.pad(w_ih, ((0, Dp - D), (0, 0)))

    # Gate column order follows nn.LSTM: i, f, g, o.
    # sigmoid(x) = 0.5*tanh(x/2) + 0.5  ->  pre-scale i/f/o gate columns of the
    # weights/bias by 0.5 here (scaling strictly local to this call) and fix up
    # in-kernel with alpha*tanh+beta, so each step needs one full-vreg tanh.
    half = jnp.full((H,), 0.5, jnp.float32)
    one = jnp.ones((H,), jnp.float32)
    scale = jnp.concatenate([half, half, one, half])          # (4H,)
    w_ih_s = (w_ih * scale[None, :]).astype(jnp.float32)      # (Dp, 4H)
    w_hh_s = (params["w_hh"] * scale[None, :]).astype(jnp.float32)
    b_s = (params["b"] * scale).reshape(1, G).astype(jnp.float32)

    # Time-major history so each per-step pre-gate slab is lane-dense.
    hist_tm = jnp.transpose(history, (1, 0, 2)).astype(jnp.float32)  # (T, Bp, Dp)
    ft2 = ft.reshape(Bp, 1)

    grid = (Bp // block_b,)
    out = pl.pallas_call(
        _lstm_last_kernel,
        out_shape=jax.ShapeDtypeStruct((Bp, H), jnp.float32),
        grid=grid,
        in_specs=[
            pl.BlockSpec((block_b, 1), lambda i: (i, 0)),           # ft
            pl.BlockSpec((T, block_b, Dp), lambda i: (0, i, 0)),    # history
            pl.BlockSpec((Dp, G), lambda i: (0, 0)),                # w_ih (scaled)
            pl.BlockSpec((H, G), lambda i: (0, 0)),                 # w_hh (scaled)
            pl.BlockSpec((1, G), lambda i: (0, 0)),                 # bias (scaled)
        ],
        out_specs=pl.BlockSpec((block_b, H), lambda i: (i, 0)),
        scratch_shapes=[pltpu.VMEM((T, block_b, G), jnp.float32)],  # pre-gates
        compiler_params=pltpu.CompilerParams(
            dimension_semantics=("parallel",)),
    )(ft2, hist_tm, w_ih_s, w_hh_s, b_s)

    # nn.Dropout in eval mode is identity.
    return out[:B]


def init_params(key, input_dim, hidden_dim):
    """Deterministic PyTorch-style LSTM init: U(-1/sqrt(H), 1/sqrt(H)).

    Weights stored transposed: w_ih (D, 4H), w_hh (H, 4H); gate column order
    i, f, g, o as in nn.LSTM; b = b_ih + b_hh.
    """
    k = 1.0 / jnp.sqrt(hidden_dim)
    k_wih, k_whh, k_bih, k_bhh = jax.random.split(key, 4)
    w_ih = jax.random.uniform(k_wih, (input_dim, 4 * hidden_dim),
                              minval=-k, maxval=k, dtype=jnp.float32)
    w_hh = jax.random.uniform(k_whh, (hidden_dim, 4 * hidden_dim),
                              minval=-k, maxval=k, dtype=jnp.float32)
    b_ih = jax.random.uniform(k_bih, (4 * hidden_dim,),
                              minval=-k, maxval=k, dtype=jnp.float32)
    b_hh = jax.random.uniform(k_bhh, (4 * hidden_dim,),
                              minval=-k, maxval=k, dtype=jnp.float32)
    return {"w_ih": w_ih, "w_hh": w_hh, "b": b_ih + b_hh}


def reference_forward(history, first_timesteps, params):
    """Pure-JAX reference (same math as the PyTorch module, eval mode).

    Row i's packed sequence is history[i, ft_i:T]; after pad_packed_sequence
    with total_length=T, outputs[i, -(ft_i+1)] is the last valid step of that
    sequence, i.e. the hidden state at absolute time T-1 -> the final h below.
    """
    B, T, D = history.shape
    H = params["w_hh"].shape[0]
    w_ih, w_hh, b = params["w_ih"], params["w_hh"], params["b"]
    h = jnp.zeros((B, H), jnp.float32)
    c = jnp.zeros((B, H), jnp.float32)
    for t in range(T):
        x_t = history[:, t, :]
        gates = (jnp.dot(x_t, w_ih, precision=lax.Precision.HIGHEST)
                 + jnp.dot(h, w_hh, precision=lax.Precision.HIGHEST) + b)
        i_g = jax.nn.sigmoid(gates[:, 0 * H:1 * H])
        f_g = jax.nn.sigmoid(gates[:, 1 * H:2 * H])
        g_g = jnp.tanh(gates[:, 2 * H:3 * H])
        o_g = jax.nn.sigmoid(gates[:, 3 * H:4 * H])
        c_new = f_g * c + i_g * g_g
        h_new = o_g * jnp.tanh(c_new)
        started = (t >= first_timesteps)[:, None]
        h = jnp.where(started, h_new, h)
        c = jnp.where(started, c_new, c)
    return h


if __name__ == "__main__":
    # Small shapes implied by the module: state history (B, T, input_dim).
    B, T, input_dim, hidden_dim = 8, 8, 6, 32
    p_dropout = 0.25  # unused at inference (eval mode -> identity)

    key = jax.random.PRNGKey(0)
    k_hist, k_params = jax.random.split(key)

    history = jax.random.normal(k_hist, (B, T, input_dim), dtype=jnp.float32)
    first_timesteps = jnp.array([0, 2, 1, 3, 0, 4, 2, 1], dtype=jnp.int32)
    params = init_params(k_params, input_dim, hidden_dim)

    fwd = jax.jit(node_history_encoder_forward)
    last_outputs = fwd(history, first_timesteps, params)
    last_outputs = jax.block_until_ready(last_outputs)

    ref = reference_forward(history, first_timesteps, params)
    assert last_outputs.shape == (B, hidden_dim)
    assert jnp.allclose(last_outputs, ref, atol=1e-4, rtol=1e-4), (
        float(jnp.max(jnp.abs(last_outputs - ref))))

    print("KERNEL_OK")
</pallas_src>

<mosaic_0001>
module attributes {stable_mosaic.version = 11 : i64} {
  func.func @_lstm_last_kernel(%arg0: i32, %arg1: memref<8x1xi32, #tpu.memory_space<vmem>>, %arg2: memref<8x8x8xf32, #tpu.memory_space<vmem>>, %arg3: memref<8x128xf32, #tpu.memory_space<vmem>>, %arg4: memref<32x128xf32, #tpu.memory_space<vmem>>, %arg5: memref<1x128xf32, #tpu.memory_space<vmem>>, %arg6: memref<8x32xf32, #tpu.memory_space<vmem>>, %arg7: memref<8x8x128xf32, #tpu.memory_space<vmem>>) attributes {dimension_semantics = [#tpu.dimension_semantics<parallel>], iteration_bounds = array<i64: 1>, scalar_prefetch = 0 : i64, scratch_operands = 1 : i64, tpu.core_type = #tpu.core_type<tc>, window_params = [{transform_indices = @transform_0, window_bounds = array<i64: 8, 1>}, {transform_indices = @transform_1, window_bounds = array<i64: 8, 8, 8>}, {pipeline_mode = #tpu.pipeline_mode<synchronous>, transform_indices = @transform_2, window_bounds = array<i64: 8, 128>}, {pipeline_mode = #tpu.pipeline_mode<synchronous>, transform_indices = @transform_3, window_bounds = array<i64: 32, 128>}, {pipeline_mode = #tpu.pipeline_mode<synchronous>, transform_indices = @transform_4, window_bounds = array<i64: 1, 128>}, {transform_indices = @transform_5, window_bounds = array<i64: 8, 32>}]} {
    %c0 = arith.constant 0 : index
    %c0_0 = arith.constant 0 : index
    %0 = vector.load %arg3[%c0, %c0_0] : memref<8x128xf32, #tpu.memory_space<vmem>>, vector<8x128xf32>
    %c0_1 = arith.constant 0 : index
    %c0_2 = arith.constant 0 : index
    %1 = vector.load %arg5[%c0_1, %c0_2] : memref<1x128xf32, #tpu.memory_space<vmem>>, vector<1x128xf32>
    %c0_3 = arith.constant 0 : index
    %c0_4 = arith.constant 0 : index
    %c0_5 = arith.constant 0 : index
    %2 = vector.load %arg2[%c0_3, %c0_4, %c0_5] : memref<8x8x8xf32, #tpu.memory_space<vmem>>, vector<1x8x8xf32>
    %3 = vector.shape_cast %2 : vector<1x8x8xf32> to vector<8x8xf32>
    %cst = arith.constant dense<0.000000e+00> : vector<8x128xf32>
    %4 = tpu.matmul %3, %0, %cst {dimension_numbers = #tpu.dot_dimension_numbers<[1], [0], [0], [1], [0, 0, 1, 1], [], []>} : vector<8x8xf32>, vector<8x128xf32>, vector<8x128xf32> -> vector<8x128xf32>
    %5 = vector.broadcast %1 : vector<1x128xf32> to vector<8x128xf32>
    %6 = arith.addf %4, %5 : vector<8x128xf32>
    %c0_6 = arith.constant 0 : index
    %c0_7 = arith.constant 0 : index
    %c0_8 = arith.constant 0 : index
    %7 = vector.load %arg7[%c0_6, %c0_7, %c0_8] : memref<8x8x128xf32, #tpu.memory_space<vmem>>, vector<1x8x128xf32>
    %8 = vector.shape_cast %7 : vector<1x8x128xf32> to vector<8x128xf32>
    %9 = vector.shape_cast %6 : vector<8x128xf32> to vector<1x8x128xf32>
    tpu.vector_store %arg7[%c0_6, %c0_7, %c0_8], %9 {strides = array<i32>} : memref<8x8x128xf32, #tpu.memory_space<vmem>>, vector<1x8x128xf32>,
    %c1 = arith.constant 1 : index
    %c0_9 = arith.constant 0 : index
    %c0_10 = arith.constant 0 : index
    %10 = vector.load %arg2[%c1, %c0_9, %c0_10] : memref<8x8x8xf32, #tpu.memory_space<vmem>>, vector<1x8x8xf32>
    %11 = vector.shape_cast %10 : vector<1x8x8xf32> to vector<8x8xf32>
    %cst_11 = arith.constant dense<0.000000e+00> : vector<8x128xf32>
    %12 = tpu.matmul %11, %0, %cst_11 {dimension_numbers = #tpu.dot_dimension_numbers<[1], [0], [0], [1], [0, 0, 1, 1], [], []>} : vector<8x8xf32>, vector<8x128xf32>, vector<8x128xf32> -> vector<8x128xf32>
    %13 = vector.broadcast %1 : vector<1x128xf32> to vector<8x128xf32>
    %14 = arith.addf %12, %13 : vector<8x128xf32>
    %c1_12 = arith.constant 1 : index
    %c0_13 = arith.constant 0 : index
    %c0_14 = arith.constant 0 : index
    %15 = vector.load %arg7[%c1_12, %c0_13, %c0_14] : memref<8x8x128xf32, #tpu.memory_space<vmem>>, vector<1x8x128xf32>
    %16 = vector.shape_cast %15 : vector<1x8x128xf32> to vector<8x128xf32>
    %17 = vector.shape_cast %14 : vector<8x128xf32> to vector<1x8x128xf32>
    tpu.vector_store %arg7[%c1_12, %c0_13, %c0_14], %17 {strides = array<i32>} : memref<8x8x128xf32, #tpu.memory_space<vmem>>, vector<1x8x128xf32>,
    %c2 = arith.constant 2 : index
    %c0_15 = arith.constant 0 : index
    %c0_16 = arith.constant 0 : index
    %18 = vector.load %arg2[%c2, %c0_15, %c0_16] : memref<8x8x8xf32, #tpu.memory_space<vmem>>, vector<1x8x8xf32>
    %19 = vector.shape_cast %18 : vector<1x8x8xf32> to vector<8x8xf32>
    %cst_17 = arith.constant dense<0.000000e+00> : vector<8x128xf32>
    %20 = tpu.matmul %19, %0, %cst_17 {dimension_numbers = #tpu.dot_dimension_numbers<[1], [0], [0], [1], [0, 0, 1, 1], [], []>} : vector<8x8xf32>, vector<8x128xf32>, vector<8x128xf32> -> vector<8x128xf32>
    %21 = vector.broadcast %1 : vector<1x128xf32> to vector<8x128xf32>
    %22 = arith.addf %20, %21 : vector<8x128xf32>
    %c2_18 = arith.constant 2 : index
    %c0_19 = arith.constant 0 : index
    %c0_20 = arith.constant 0 : index
    %23 = vector.load %arg7[%c2_18, %c0_19, %c0_20] : memref<8x8x128xf32, #tpu.memory_space<vmem>>, vector<1x8x128xf32>
    %24 = vector.shape_cast %23 : vector<1x8x128xf32> to vector<8x128xf32>
    %25 = vector.shape_cast %22 : vector<8x128xf32> to vector<1x8x128xf32>
    tpu.vector_store %arg7[%c2_18, %c0_19, %c0_20], %25 {strides = array<i32>} : memref<8x8x128xf32, #tpu.memory_space<vmem>>, vector<1x8x128xf32>,
    %c3 = arith.constant 3 : index
    %c0_21 = arith.constant 0 : index
    %c0_22 = arith.constant 0 : index
    %26 = vector.load %arg2[%c3, %c0_21, %c0_22] : memref<8x8x8xf32, #tpu.memory_space<vmem>>, vector<1x8x8xf32>
    %27 = vector.shape_cast %26 : vector<1x8x8xf32> to vector<8x8xf32>
    %cst_23 = arith.constant dense<0.000000e+00> : vector<8x128xf32>
    %28 = tpu.matmul %27, %0, %cst_23 {dimension_numbers = #tpu.dot_dimension_numbers<[1], [0], [0], [1], [0, 0, 1, 1], [], []>} : vector<8x8xf32>, vector<8x128xf32>, vector<8x128xf32> -> vector<8x128xf32>
    %29 = vector.broadcast %1 : vector<1x128xf32> to vector<8x128xf32>
    %30 = arith.addf %28, %29 : vector<8x128xf32>
    %c3_24 = arith.constant 3 : index
    %c0_25 = arith.constant 0 : index
    %c0_26 = arith.constant 0 : index
    %31 = vector.load %arg7[%c3_24, %c0_25, %c0_26] : memref<8x8x128xf32, #tpu.memory_space<vmem>>, vector<1x8x128xf32>
    %32 = vector.shape_cast %31 : vector<1x8x128xf32> to vector<8x128xf32>
    %33 = vector.shape_cast %30 : vector<8x128xf32> to vector<1x8x128xf32>
    tpu.vector_store %arg7[%c3_24, %c0_25, %c0_26], %33 {strides = array<i32>} : memref<8x8x128xf32, #tpu.memory_space<vmem>>, vector<1x8x128xf32>,
    %c4 = arith.constant 4 : index
    %c0_27 = arith.constant 0 : index
    %c0_28 = arith.constant 0 : index
    %34 = vector.load %arg2[%c4, %c0_27, %c0_28] : memref<8x8x8xf32, #tpu.memory_space<vmem>>, vector<1x8x8xf32>
    %35 = vector.shape_cast %34 : vector<1x8x8xf32> to vector<8x8xf32>
    %cst_29 = arith.constant dense<0.000000e+00> : vector<8x128xf32>
    %36 = tpu.matmul %35, %0, %cst_29 {dimension_numbers = #tpu.dot_dimension_numbers<[1], [0], [0], [1], [0, 0, 1, 1], [], []>} : vector<8x8xf32>, vector<8x128xf32>, vector<8x128xf32> -> vector<8x128xf32>
    %37 = vector.broadcast %1 : vector<1x128xf32> to vector<8x128xf32>
    %38 = arith.addf %36, %37 : vector<8x128xf32>
    %c4_30 = arith.constant 4 : index
    %c0_31 = arith.constant 0 : index
    %c0_32 = arith.constant 0 : index
    %39 = vector.load %arg7[%c4_30, %c0_31, %c0_32] : memref<8x8x128xf32, #tpu.memory_space<vmem>>, vector<1x8x128xf32>
    %40 = vector.shape_cast %39 : vector<1x8x128xf32> to vector<8x128xf32>
    %41 = vector.shape_cast %38 : vector<8x128xf32> to vector<1x8x128xf32>
    tpu.vector_store %arg7[%c4_30, %c0_31, %c0_32], %41 {strides = array<i32>} : memref<8x8x128xf32, #tpu.memory_space<vmem>>, vector<1x8x128xf32>,
    %c5 = arith.constant 5 : index
    %c0_33 = arith.constant 0 : index
    %c0_34 = arith.constant 0 : index
    %42 = vector.load %arg2[%c5, %c0_33, %c0_34] : memref<8x8x8xf32, #tpu.memory_space<vmem>>, vector<1x8x8xf32>
    %43 = vector.shape_cast %42 : vector<1x8x8xf32> to vector<8x8xf32>
    %cst_35 = arith.constant dense<0.000000e+00> : vector<8x128xf32>
    %44 = tpu.matmul %43, %0, %cst_35 {dimension_numbers = #tpu.dot_dimension_numbers<[1], [0], [0], [1], [0, 0, 1, 1], [], []>} : vector<8x8xf32>, vector<8x128xf32>, vector<8x128xf32> -> vector<8x128xf32>
    %45 = vector.broadcast %1 : vector<1x128xf32> to vector<8x128xf32>
    %46 = arith.addf %44, %45 : vector<8x128xf32>
    %c5_36 = arith.constant 5 : index
    %c0_37 = arith.constant 0 : index
    %c0_38 = arith.constant 0 : index
    %47 = vector.load %arg7[%c5_36, %c0_37, %c0_38] : memref<8x8x128xf32, #tpu.memory_space<vmem>>, vector<1x8x128xf32>
    %48 = vector.shape_cast %47 : vector<1x8x128xf32> to vector<8x128xf32>
    %49 = vector.shape_cast %46 : vector<8x128xf32> to vector<1x8x128xf32>
    tpu.vector_store %arg7[%c5_36, %c0_37, %c0_38], %49 {strides = array<i32>} : memref<8x8x128xf32, #tpu.memory_space<vmem>>, vector<1x8x128xf32>,
    %c6 = arith.constant 6 : index
    %c0_39 = arith.constant 0 : index
    %c0_40 = arith.constant 0 : index
    %50 = vector.load %arg2[%c6, %c0_39, %c0_40] : memref<8x8x8xf32, #tpu.memory_space<vmem>>, vector<1x8x8xf32>
    %51 = vector.shape_cast %50 : vector<1x8x8xf32> to vector<8x8xf32>
    %cst_41 = arith.constant dense<0.000000e+00> : vector<8x128xf32>
    %52 = tpu.matmul %51, %0, %cst_41 {dimension_numbers = #tpu.dot_dimension_numbers<[1], [0], [0], [1], [0, 0, 1, 1], [], []>} : vector<8x8xf32>, vector<8x128xf32>, vector<8x128xf32> -> vector<8x128xf32>
    %53 = vector.broadcast %1 : vector<1x128xf32> to vector<8x128xf32>
    %54 = arith.addf %52, %53 : vector<8x128xf32>
    %c6_42 = arith.constant 6 : index
    %c0_43 = arith.constant 0 : index
    %c0_44 = arith.constant 0 : index
    %55 = vector.load %arg7[%c6_42, %c0_43, %c0_44] : memref<8x8x128xf32, #tpu.memory_space<vmem>>, vector<1x8x128xf32>
    %56 = vector.shape_cast %55 : vector<1x8x128xf32> to vector<8x128xf32>
    %57 = vector.shape_cast %54 : vector<8x128xf32> to vector<1x8x128xf32>
    tpu.vector_store %arg7[%c6_42, %c0_43, %c0_44], %57 {strides = array<i32>} : memref<8x8x128xf32, #tpu.memory_space<vmem>>, vector<1x8x128xf32>,
    %c7 = arith.constant 7 : index
    %c0_45 = arith.constant 0 : index
    %c0_46 = arith.constant 0 : index
    %58 = vector.load %arg2[%c7, %c0_45, %c0_46] : memref<8x8x8xf32, #tpu.memory_space<vmem>>, vector<1x8x8xf32>
    %59 = vector.shape_cast %58 : vector<1x8x8xf32> to vector<8x8xf32>
    %cst_47 = arith.constant dense<0.000000e+00> : vector<8x128xf32>
    %60 = tpu.matmul %59, %0, %cst_47 {dimension_numbers = #tpu.dot_dimension_numbers<[1], [0], [0], [1], [0, 0, 1, 1], [], []>} : vector<8x8xf32>, vector<8x128xf32>, vector<8x128xf32> -> vector<8x128xf32>
    %61 = vector.broadcast %1 : vector<1x128xf32> to vector<8x128xf32>
    %62 = arith.addf %60, %61 : vector<8x128xf32>
    %c7_48 = arith.constant 7 : index
    %c0_49 = arith.constant 0 : index
    %c0_50 = arith.constant 0 : index
    %63 = vector.load %arg7[%c7_48, %c0_49, %c0_50] : memref<8x8x128xf32, #tpu.memory_space<vmem>>, vector<1x8x128xf32>
    %64 = vector.shape_cast %63 : vector<1x8x128xf32> to vector<8x128xf32>
    %65 = vector.shape_cast %62 : vector<8x128xf32> to vector<1x8x128xf32>
    tpu.vector_store %arg7[%c7_48, %c0_49, %c0_50], %65 {strides = array<i32>} : memref<8x8x128xf32, #tpu.memory_space<vmem>>, vector<1x8x128xf32>,
    %c0_51 = arith.constant 0 : index
    %c0_52 = arith.constant 0 : index
    %66 = vector.load %arg4[%c0_51, %c0_52] : memref<32x128xf32, #tpu.memory_space<vmem>>, vector<32x128xf32>
    %c0_53 = arith.constant 0 : index
    %c0_54 = arith.constant 0 : index
    %67 = vector.load %arg1[%c0_53, %c0_54] : memref<8x1xi32, #tpu.memory_space<vmem>>, vector<8x1xi32>
    %68 = vector.shape_cast %67 : vector<8x1xi32> to vector<8x1xi32>
    %69 = vector.broadcast %68 : vector<8x1xi32> to vector<8x32xi32>
    %70 = tpu.iota {dimensions = array<i32: 1>} : vector<8x128xi32>
    %c64_i32 = arith.constant 64 : i32
    %71 = vector.broadcast %c64_i32 : i32 to vector<8x128xi32>
    %72 = arith.cmpi sge, %70, %71 : vector<8x128xi32>
    %c96_i32 = arith.constant 96 : i32
    %73 = vector.broadcast %c96_i32 : i32 to vector<8x128xi32>
    %74 = arith.cmpi slt, %70, %73 : vector<8x128xi32>
    %75 = arith.andi %72, %74 : vector<8x128xi1>
    %cst_55 = arith.constant 1.000000e+00 : f32
    %cst_56 = arith.constant 5.000000e-01 : f32
    %76 = vector.broadcast %cst_55 : f32 to vector<8x128xf32>
    %77 = vector.broadcast %cst_56 : f32 to vector<8x128xf32>
    %78 = arith.select %75, %76, %77 : vector<8x128xi1>, vector<8x128xf32>
    %cst_57 = arith.constant 0.000000e+00 : f32
    %cst_58 = arith.constant 5.000000e-01 : f32
    %79 = vector.broadcast %cst_57 : f32 to vector<8x128xf32>
    %80 = vector.broadcast %cst_58 : f32 to vector<8x128xf32>
    %81 = arith.select %75, %79, %80 : vector<8x128xi1>, vector<8x128xf32>
    %cst_59 = arith.constant 0.000000e+00 : f32
    %82 = vector.broadcast %cst_59 : f32 to vector<8x32xf32>
    %cst_60 = arith.constant 0.000000e+00 : f32
    %83 = vector.broadcast %cst_60 : f32 to vector<8x32xf32>
    %c0_61 = arith.constant 0 : index
    %c0_62 = arith.constant 0 : index
    %c0_63 = arith.constant 0 : index
    %84 = vector.load %arg7[%c0_61, %c0_62, %c0_63] : memref<8x8x128xf32, #tpu.memory_space<vmem>>, vector<1x8x128xf32>
    %85 = vector.shape_cast %84 : vector<1x8x128xf32> to vector<8x128xf32>
    %cst_64 = arith.constant dense<0.000000e+00> : vector<8x128xf32>
    %86 = tpu.matmul %82, %66, %cst_64 {dimension_numbers = #tpu.dot_dimension_numbers<[1], [0], [0], [1], [0, 0, 1, 1], [], []>} : vector<8x32xf32>, vector<32x128xf32>, vector<8x128xf32> -> vector<8x128xf32>
    %87 = arith.addf %85, %86 : vector<8x128xf32>
    %88 = math.tanh %87 : vector<8x128xf32>
    %89 = arith.mulf %78, %88 : vector<8x128xf32>
    %90 = arith.addf %89, %81 : vector<8x128xf32>
    %91 = vector.extract_strided_slice %90 {offsets = [0, 0], sizes = [8, 32], strides = [1, 1]} : vector<8x128xf32> to vector<8x32xf32>
    %92 = vector.extract_strided_slice %90 {offsets = [0, 32], sizes = [8, 32], strides = [1, 1]} : vector<8x128xf32> to vector<8x32xf32>
    %93 = vector.extract_strided_slice %90 {offsets = [0, 64], sizes = [8, 32], strides = [1, 1]} : vector<8x128xf32> to vector<8x32xf32>
    %94 = vector.extract_strided_slice %90 {offsets = [0, 96], sizes = [8, 32], strides = [1, 1]} : vector<8x128xf32> to vector<8x32xf32>
    %95 = arith.mulf %92, %83 : vector<8x32xf32>
    %96 = arith.mulf %91, %93 : vector<8x32xf32>
    %97 = arith.addf %95, %96 : vector<8x32xf32>
    %98 = math.tanh %97 : vector<8x32xf32>
    %99 = arith.mulf %94, %98 : vector<8x32xf32>
    %c0_i32 = arith.constant 0 : i32
    %100 = vector.broadcast %c0_i32 : i32 to vector<8x32xi32>
    %101 = arith.cmpi sle, %69, %100 : vector<8x32xi32>
    %102 = arith.select %101, %99, %82 : vector<8x32xi1>, vector<8x32xf32>
    %103 = arith.select %101, %97, %83 : vector<8x32xi1>, vector<8x32xf32>
    %c1_65 = arith.constant 1 : index
    %c0_66 = arith.constant 0 : index
    %c0_67 = arith.constant 0 : index
    %104 = vector.load %arg7[%c1_65, %c0_66, %c0_67] : memref<8x8x128xf32, #tpu.memory_space<vmem>>, vector<1x8x128xf32>
    %105 = vector.shape_cast %104 : vector<1x8x128xf32> to vector<8x128xf32>
    %cst_68 = arith.constant dense<0.000000e+00> : vector<8x128xf32>
    %106 = tpu.matmul %102, %66, %cst_68 {dimension_numbers = #tpu.dot_dimension_numbers<[1], [0], [0], [1], [0, 0, 1, 1], [], []>} : vector<8x32xf32>, vector<32x128xf32>, vector<8x128xf32> -> vector<8x128xf32>
    %107 = arith.addf %105, %106 : vector<8x128xf32>
    %108 = math.tanh %107 : vector<8x128xf32>
    %109 = arith.mulf %78, %108 : vector<8x128xf32>
    %110 = arith.addf %109, %81 : vector<8x128xf32>
    %111 = vector.extract_strided_slice %110 {offsets = [0, 0], sizes = [8, 32], strides = [1, 1]} : vector<8x128xf32> to vector<8x32xf32>
    %112 = vector.extract_strided_slice %110 {offsets = [0, 32], sizes = [8, 32], strides = [1, 1]} : vector<8x128xf32> to vector<8x32xf32>
    %113 = vector.extract_strided_slice %110 {offsets = [0, 64], sizes = [8, 32], strides = [1, 1]} : vector<8x128xf32> to vector<8x32xf32>
    %114 = vector.extract_strided_slice %110 {offsets = [0, 96], sizes = [8, 32], strides = [1, 1]} : vector<8x128xf32> to vector<8x32xf32>
    %115 = arith.mulf %112, %103 : vector<8x32xf32>
    %116 = arith.mulf %111, %113 : vector<8x32xf32>
    %117 = arith.addf %115, %116 : vector<8x32xf32>
    %118 = math.tanh %117 : vector<8x32xf32>
    %119 = arith.mulf %114, %118 : vector<8x32xf32>
    %c1_i32 = arith.constant 1 : i32
    %120 = vector.broadcast %c1_i32 : i32 to vector<8x32xi32>
    %121 = arith.cmpi sle, %69, %120 : vector<8x32xi32>
    %122 = arith.select %121, %119, %102 : vector<8x32xi1>, vector<8x32xf32>
    %123 = arith.select %121, %117, %103 : vector<8x32xi1>, vector<8x32xf32>
    %c2_69 = arith.constant 2 : index
    %c0_70 = arith.constant 0 : index
    %c0_71 = arith.constant 0 : index
    %124 = vector.load %arg7[%c2_69, %c0_70, %c0_71] : memref<8x8x128xf32, #tpu.memory_space<vmem>>, vector<1x8x128xf32>
    %125 = vector.shape_cast %124 : vector<1x8x128xf32> to vector<8x128xf32>
    %cst_72 = arith.constant dense<0.000000e+00> : vector<8x128xf32>
    %126 = tpu.matmul %122, %66, %cst_72 {dimension_numbers = #tpu.dot_dimension_numbers<[1], [0], [0], [1], [0, 0, 1, 1], [], []>} : vector<8x32xf32>, vector<32x128xf32>, vector<8x128xf32> -> vector<8x128xf32>
    %127 = arith.addf %125, %126 : vector<8x128xf32>
    %128 = math.tanh %127 : vector<8x128xf32>
    %129 = arith.mulf %78, %128 : vector<8x128xf32>
    %130 = arith.addf %129, %81 : vector<8x128xf32>
    %131 = vector.extract_strided_slice %130 {offsets = [0, 0], sizes = [8, 32], strides = [1, 1]} : vector<8x128xf32> to vector<8x32xf32>
    %132 = vector.extract_strided_slice %130 {offsets = [0, 32], sizes = [8, 32], strides = [1, 1]} : vector<8x128xf32> to vector<8x32xf32>
    %133 = vector.extract_strided_slice %130 {offsets = [0, 64], sizes = [8, 32], strides = [1, 1]} : vector<8x128xf32> to vector<8x32xf32>
    %134 = vector.extract_strided_slice %130 {offsets = [0, 96], sizes = [8, 32], strides = [1, 1]} : vector<8x128xf32> to vector<8x32xf32>
    %135 = arith.mulf %132, %123 : vector<8x32xf32>
    %136 = arith.mulf %131, %133 : vector<8x32xf32>
    %137 = arith.addf %135, %136 : vector<8x32xf32>
    %138 = math.tanh %137 : vector<8x32xf32>
    %139 = arith.mulf %134, %138 : vector<8x32xf32>
    %c2_i32 = arith.constant 2 : i32
    %140 = vector.broadcast %c2_i32 : i32 to vector<8x32xi32>
    %141 = arith.cmpi sle, %69, %140 : vector<8x32xi32>
    %142 = arith.select %141, %139, %122 : vector<8x32xi1>, vector<8x32xf32>
    %143 = arith.select %141, %137, %123 : vector<8x32xi1>, vector<8x32xf32>
    %c3_73 = arith.constant 3 : index
    %c0_74 = arith.constant 0 : index
    %c0_75 = arith.constant 0 : index
    %144 = vector.load %arg7[%c3_73, %c0_74, %c0_75] : memref<8x8x128xf32, #tpu.memory_space<vmem>>, vector<1x8x128xf32>
    %145 = vector.shape_cast %144 : vector<1x8x128xf32> to vector<8x128xf32>
    %cst_76 = arith.constant dense<0.000000e+00> : vector<8x128xf32>
    %146 = tpu.matmul %142, %66, %cst_76 {dimension_numbers = #tpu.dot_dimension_numbers<[1], [0], [0], [1], [0, 0, 1, 1], [], []>} : vector<8x32xf32>, vector<32x128xf32>, vector<8x128xf32> -> vector<8x128xf32>
    %147 = arith.addf %145, %146 : vector<8x128xf32>
    %148 = math.tanh %147 : vector<8x128xf32>
    %149 = arith.mulf %78, %148 : vector<8x128xf32>
    %150 = arith.addf %149, %81 : vector<8x128xf32>
    %151 = vector.extract_strided_slice %150 {offsets = [0, 0], sizes = [8, 32], strides = [1, 1]} : vector<8x128xf32> to vector<8x32xf32>
    %152 = vector.extract_strided_slice %150 {offsets = [0, 32], sizes = [8, 32], strides = [1, 1]} : vector<8x128xf32> to vector<8x32xf32>
    %153 = vector.extract_strided_slice %150 {offsets = [0, 64], sizes = [8, 32], strides = [1, 1]} : vector<8x128xf32> to vector<8x32xf32>
    %154 = vector.extract_strided_slice %150 {offsets = [0, 96], sizes = [8, 32], strides = [1, 1]} : vector<8x128xf32> to vector<8x32xf32>
    %155 = arith.mulf %152, %143 : vector<8x32xf32>
    %156 = arith.mulf %151, %153 : vector<8x32xf32>
    %157 = arith.addf %155, %156 : vector<8x32xf32>
    %158 = math.tanh %157 : vector<8x32xf32>
    %159 = arith.mulf %154, %158 : vector<8x32xf32>
    %c3_i32 = arith.constant 3 : i32
    %160 = vector.broadcast %c3_i32 : i32 to vector<8x32xi32>
    %161 = arith.cmpi sle, %69, %160 : vector<8x32xi32>
    %162 = arith.select %161, %159, %142 : vector<8x32xi1>, vector<8x32xf32>
    %163 = arith.select %161, %157, %143 : vector<8x32xi1>, vector<8x32xf32>
    %c4_77 = arith.constant 4 : index
    %c0_78 = arith.constant 0 : index
    %c0_79 = arith.constant 0 : index
    %164 = vector.load %arg7[%c4_77, %c0_78, %c0_79] : memref<8x8x128xf32, #tpu.memory_space<vmem>>, vector<1x8x128xf32>
    %165 = vector.shape_cast %164 : vector<1x8x128xf32> to vector<8x128xf32>
    %cst_80 = arith.constant dense<0.000000e+00> : vector<8x128xf32>
    %166 = tpu.matmul %162, %66, %cst_80 {dimension_numbers = #tpu.dot_dimension_numbers<[1], [0], [0], [1], [0, 0, 1, 1], [], []>} : vector<8x32xf32>, vector<32x128xf32>, vector<8x128xf32> -> vector<8x128xf32>
    %167 = arith.addf %165, %166 : vector<8x128xf32>
    %168 = math.tanh %167 : vector<8x128xf32>
    %169 = arith.mulf %78, %168 : vector<8x128xf32>
    %170 = arith.addf %169, %81 : vector<8x128xf32>
    %171 = vector.extract_strided_slice %170 {offsets = [0, 0], sizes = [8, 32], strides = [1, 1]} : vector<8x128xf32> to vector<8x32xf32>
    %172 = vector.extract_strided_slice %170 {offsets = [0, 32], sizes = [8, 32], strides = [1, 1]} : vector<8x128xf32> to vector<8x32xf32>
    %173 = vector.extract_strided_slice %170 {offsets = [0, 64], sizes = [8, 32], strides = [1, 1]} : vector<8x128xf32> to vector<8x32xf32>
    %174 = vector.extract_strided_slice %170 {offsets = [0, 96], sizes = [8, 32], strides = [1, 1]} : vector<8x128xf32> to vector<8x32xf32>
    %175 = arith.mulf %172, %163 : vector<8x32xf32>
    %176 = arith.mulf %171, %173 : vector<8x32xf32>
    %177 = arith.addf %175, %176 : vector<8x32xf32>
    %178 = math.tanh %177 : vector<8x32xf32>
    %179 = arith.mulf %174, %178 : vector<8x32xf32>
    %c4_i32 = arith.constant 4 : i32
    %180 = vector.broadcast %c4_i32 : i32 to vector<8x32xi32>
    %181 = arith.cmpi sle, %69, %180 : vector<8x32xi32>
    %182 = arith.select %181, %179, %162 : vector<8x32xi1>, vector<8x32xf32>
    %183 = arith.select %181, %177, %163 : vector<8x32xi1>, vector<8x32xf32>
    %c5_81 = arith.constant 5 : index
    %c0_82 = arith.constant 0 : index
    %c0_83 = arith.constant 0 : index
    %184 = vector.load %arg7[%c5_81, %c0_82, %c0_83] : memref<8x8x128xf32, #tpu.memory_space<vmem>>, vector<1x8x128xf32>
    %185 = vector.shape_cast %184 : vector<1x8x128xf32> to vector<8x128xf32>
    %cst_84 = arith.constant dense<0.000000e+00> : vector<8x128xf32>
    %186 = tpu.matmul %182, %66, %cst_84 {dimension_numbers = #tpu.dot_dimension_numbers<[1], [0], [0], [1], [0, 0, 1, 1], [], []>} : vector<8x32xf32>, vector<32x128xf32>, vector<8x128xf32> -> vector<8x128xf32>
    %187 = arith.addf %185, %186 : vector<8x128xf32>
    %188 = math.tanh %187 : vector<8x128xf32>
    %189 = arith.mulf %78, %188 : vector<8x128xf32>
    %190 = arith.addf %189, %81 : vector<8x128xf32>
    %191 = vector.extract_strided_slice %190 {offsets = [0, 0], sizes = [8, 32], strides = [1, 1]} : vector<8x128xf32> to vector<8x32xf32>
    %192 = vector.extract_strided_slice %190 {offsets = [0, 32], sizes = [8, 32], strides = [1, 1]} : vector<8x128xf32> to vector<8x32xf32>
    %193 = vector.extract_strided_slice %190 {offsets = [0, 64], sizes = [8, 32], strides = [1, 1]} : vector<8x128xf32> to vector<8x32xf32>
    %194 = vector.extract_strided_slice %190 {offsets = [0, 96], sizes = [8, 32], strides = [1, 1]} : vector<8x128xf32> to vector<8x32xf32>
    %195 = arith.mulf %192, %183 : vector<8x32xf32>
    %196 = arith.mulf %191, %193 : vector<8x32xf32>
    %197 = arith.addf %195, %196 : vector<8x32xf32>
    %198 = math.tanh %197 : vector<8x32xf32>
    %199 = arith.mulf %194, %198 : vector<8x32xf32>
    %c5_i32 = arith.constant 5 : i32
    %200 = vector.broadcast %c5_i32 : i32 to vector<8x32xi32>
    %201 = arith.cmpi sle, %69, %200 : vector<8x32xi32>
    %202 = arith.select %201, %199, %182 : vector<8x32xi1>, vector<8x32xf32>
    %203 = arith.select %201, %197, %183 : vector<8x32xi1>, vector<8x32xf32>
    %c6_85 = arith.constant 6 : index
    %c0_86 = arith.constant 0 : index
    %c0_87 = arith.constant 0 : index
    %204 = vector.load %arg7[%c6_85, %c0_86, %c0_87] : memref<8x8x128xf32, #tpu.memory_space<vmem>>, vector<1x8x128xf32>
    %205 = vector.shape_cast %204 : vector<1x8x128xf32> to vector<8x128xf32>
    %cst_88 = arith.constant dense<0.000000e+00> : vector<8x128xf32>
    %206 = tpu.matmul %202, %66, %cst_88 {dimension_numbers = #tpu.dot_dimension_numbers<[1], [0], [0], [1], [0, 0, 1, 1], [], []>} : vector<8x32xf32>, vector<32x128xf32>, vector<8x128xf32> -> vector<8x128xf32>
    %207 = arith.addf %205, %206 : vector<8x128xf32>
    %208 = math.tanh %207 : vector<8x128xf32>
    %209 = arith.mulf %78, %208 : vector<8x128xf32>
    %210 = arith.addf %209, %81 : vector<8x128xf32>
    %211 = vector.extract_strided_slice %210 {offsets = [0, 0], sizes = [8, 32], strides = [1, 1]} : vector<8x128xf32> to vector<8x32xf32>
    %212 = vector.extract_strided_slice %210 {offsets = [0, 32], sizes = [8, 32], strides = [1, 1]} : vector<8x128xf32> to vector<8x32xf32>
    %213 = vector.extract_strided_slice %210 {offsets = [0, 64], sizes = [8, 32], strides = [1, 1]} : vector<8x128xf32> to vector<8x32xf32>
    %214 = vector.extract_strided_slice %210 {offsets = [0, 96], sizes = [8, 32], strides = [1, 1]} : vector<8x128xf32> to vector<8x32xf32>
    %215 = arith.mulf %212, %203 : vector<8x32xf32>
    %216 = arith.mulf %211, %213 : vector<8x32xf32>
    %217 = arith.addf %215, %216 : vector<8x32xf32>
    %218 = math.tanh %217 : vector<8x32xf32>
    %219 = arith.mulf %214, %218 : vector<8x32xf32>
    %c6_i32 = arith.constant 6 : i32
    %220 = vector.broadcast %c6_i32 : i32 to vector<8x32xi32>
    %221 = arith.cmpi sle, %69, %220 : vector<8x32xi32>
    %222 = arith.select %221, %219, %202 : vector<8x32xi1>, vector<8x32xf32>
    %223 = arith.select %221, %217, %203 : vector<8x32xi1>, vector<8x32xf32>
    %c7_89 = arith.constant 7 : index
    %c0_90 = arith.constant 0 : index
    %c0_91 = arith.constant 0 : index
    %224 = vector.load %arg7[%c7_89, %c0_90, %c0_91] : memref<8x8x128xf32, #tpu.memory_space<vmem>>, vector<1x8x128xf32>
    %225 = vector.shape_cast %224 : vector<1x8x128xf32> to vector<8x128xf32>
    %cst_92 = arith.constant dense<0.000000e+00> : vector<8x128xf32>
    %226 = tpu.matmul %222, %66, %cst_92 {dimension_numbers = #tpu.dot_dimension_numbers<[1], [0], [0], [1], [0, 0, 1, 1], [], []>} : vector<8x32xf32>, vector<32x128xf32>, vector<8x128xf32> -> vector<8x128xf32>
    %227 = arith.addf %225, %226 : vector<8x128xf32>
    %228 = math.tanh %227 : vector<8x128xf32>
    %229 = arith.mulf %78, %228 : vector<8x128xf32>
    %230 = arith.addf %229, %81 : vector<8x128xf32>
    %231 = vector.extract_strided_slice %230 {offsets = [0, 0], sizes = [8, 32], strides = [1, 1]} : vector<8x128xf32> to vector<8x32xf32>
    %232 = vector.extract_strided_slice %230 {offsets = [0, 32], sizes = [8, 32], strides = [1, 1]} : vector<8x128xf32> to vector<8x32xf32>
    %233 = vector.extract_strided_slice %230 {offsets = [0, 64], sizes = [8, 32], strides = [1, 1]} : vector<8x128xf32> to vector<8x32xf32>
    %234 = vector.extract_strided_slice %230 {offsets = [0, 96], sizes = [8, 32], strides = [1, 1]} : vector<8x128xf32> to vector<8x32xf32>
    %235 = arith.mulf %232, %223 : vector<8x32xf32>
    %236 = arith.mulf %231, %233 : vector<8x32xf32>
    %237 = arith.addf %235, %236 : vector<8x32xf32>
    %238 = math.tanh %237 : vector<8x32xf32>
    %239 = arith.mulf %234, %238 : vector<8x32xf32>
    %c7_i32 = arith.constant 7 : i32
    %240 = vector.broadcast %c7_i32 : i32 to vector<8x32xi32>
    %241 = arith.cmpi sle, %69, %240 : vector<8x32xi32>
    %242 = arith.select %241, %239, %222 : vector<8x32xi1>, vector<8x32xf32>
    %c0_93 = arith.constant 0 : index
    %c0_94 = arith.constant 0 : index
    %243 = vector.load %arg6[%c0_93, %c0_94] : memref<8x32xf32, #tpu.memory_space<vmem>>, vector<8x32xf32>
    tpu.vector_store %arg6[%c0_93, %c0_94], %242 {strides = array<i32>} : memref<8x32xf32, #tpu.memory_space<vmem>>, vector<8x32xf32>,
    return
  }
  func.func @transform_0(%arg0: i32) -> (i32, i32) {
    %c0_i32 = arith.constant 0 : i32
    %c0_i32_0 = arith.constant 0 : i32
    return %arg0, %c0_i32 : i32, i32
  }
  func.func @transform_1(%arg0: i32) -> (i32, i32, i32) {
    %c0_i32 = arith.constant 0 : i32
    %c0_i32_0 = arith.constant 0 : i32
    %c0_i32_1 = arith.constant 0 : i32
    return %c0_i32, %arg0, %c0_i32_0 : i32, i32, i32
  }
  func.func @transform_2(%arg0: i32) -> (i32, i32) {
    %c0_i32 = arith.constant 0 : i32
    %c0_i32_0 = arith.constant 0 : i32
    %c0_i32_1 = arith.constant 0 : i32
    return %c0_i32, %c0_i32_0 : i32, i32
  }
  func.func @transform_3(%arg0: i32) -> (i32, i32) {
    %c0_i32 = arith.constant 0 : i32
    %c0_i32_0 = arith.constant 0 : i32
    %c0_i32_1 = arith.constant 0 : i32
    return %c0_i32, %c0_i32_0 : i32, i32
  }
  func.func @transform_4(%arg0: i32) -> (i32, i32) {
    %c0_i32 = arith.constant 0 : i32
    %c0_i32_0 = arith.constant 0 : i32
    %c0_i32_1 = arith.constant 0 : i32
    return %c0_i32, %c0_i32_0 : i32, i32
  }
  func.func @transform_5(%arg0: i32) -> (i32, i32) {
    %c0_i32 = arith.constant 0 : i32
    %c0_i32_0 = arith.constant 0 : i32
    return %arg0, %c0_i32 : i32, i32
  }
}

</mosaic_0001>

<llo_original>
// kernel: node_history_encoder_forward.1
$region0: #{node_history_encoder_forward.1}
  #allocation0 [shape = 'u32[]', space=smem, size = 0x4, offset = 0x4, fixed_abs, tag = 'smem constant byte address 0x4 - core index']
  #allocation1 [shape = 'u32[72,128]{1,0:T(1,128)}', space=vmem, size = 0x9000, scoped, tag = 'internal scratch']
  #allocation2 [shape = 'f32[8,8,128]{2,1,0:T(8,128)}', space=vmem, size = 0x8000, scoped, tag = 'scratch operand']
  %s0 = inlined_call_operand.vmem [shape: s32[8,1], index: 0, kind: input, shape index: {}]
  %s1 = inlined_call_operand.vmem [shape: f32[8,8,8], index: 1, kind: input, shape index: {}]
  %s2 = inlined_call_operand.vmem [shape: f32[8,128], index: 2, kind: input, shape index: {}]
  %s3 = inlined_call_operand.vmem [shape: f32[32,128], index: 3, kind: input, shape index: {}]
  %s4 = inlined_call_operand.vmem [shape: f32[1,128], index: 4, kind: input, shape index: {}]
  %s5 = inlined_call_operand.hbm [shape: f32[8,32], index: 5, kind: output, shape index: {}]
  %s6 = sld [smem:[#allocation0]]
  $region30: #{node_history_encoder_forward.1} parent=0
    _
  %s8 = ssub.s32 1, %s6
  %s9 = scalar_select 0, %s8, %s6
  $region1: #{node_history_encoder_forward.1} parent=0
    #allocation3 [shape = 'u8[4096]{0}', space=vmem, size = 0x1000, scoped, tag = 'output window, operand 0, single buffered']
    #allocation4 [shape = 's32[1]{0}', space=sflag, size = 0x4, scoped, tag = 'scoped memory for node_history_encoder_forward.1']
    %10 = vsyncpa [#allocation4], 0
    // Predicated region
    $region2: #{node_history_encoder_forward.1} parent=1 // pred_check
      _
    $region3: #{node_history_encoder_forward.1} parent=1 // pred_check_branch
      %12 = sbr.rel (0) target = $region5
    $region4: #{node_history_encoder_forward.1} parent=1 // pred_region
      _
    $region5: #{node_history_encoder_forward.1} parent=1 // pred_fallthru
      _
    // Predicated region
    $region6: #{node_history_encoder_forward.1} parent=1 // pred_check
      _
    $region7: #{node_history_encoder_forward.1} parent=1 // pred_check_branch
      %14 = sbr.rel (0) target = $region9
    $region8: #{node_history_encoder_forward.1} parent=1 // pred_region
      _
    $region9: #{node_history_encoder_forward.1} parent=1 // pred_fallthru
      _
    // Predicated region
    $region10: #{node_history_encoder_forward.1} parent=1 // pred_check
      _
    $region11: #{node_history_encoder_forward.1} parent=1 // pred_check_branch
      %16 = sbr.rel (0) target = $region13
    $region12: #{node_history_encoder_forward.1} parent=1 // pred_region
      _
    $region13: #{node_history_encoder_forward.1} parent=1 // pred_fallthru
      _
    // Predicated region
    $region14: #{node_history_encoder_forward.1} parent=1 // pred_check
      _
    $region15: #{node_history_encoder_forward.1} parent=1 // pred_check_branch
      %18 = sbr.rel (0) target = $region17
    $region16: #{node_history_encoder_forward.1} parent=1 // pred_region
      _
    $region17: #{node_history_encoder_forward.1} parent=1 // pred_fallthru
      _
    // Predicated region
    $region18: #{node_history_encoder_forward.1} parent=1 // pred_check
      _
    $region19: #{node_history_encoder_forward.1} parent=1 // pred_check_branch
      %20 = sbr.rel (0) target = $region21
    $region20: #{node_history_encoder_forward.1} parent=1 // pred_region
      _
    $region21: #{node_history_encoder_forward.1} parent=1 // pred_fallthru
      _
    %v21 = vld [vmem:[%s2] sm:$0xff]
    %v22 = vld [vmem:[%s4] sm:$0x1]
    %v23 = vld [vmem:[%s1] sm:$0xff]
    %v25 = vperm.slane %v22, 0
    %vm27 = vcmask 64512
    %v29 = vsel %vm27, %v23, 0
    %31 = vmatpush.msra.mxu0 0.0
    %32 = vmatpush.msra.mxu0 0.0
    %33 = vmatpush.msra.mxu0 0.0
    %34 = vmatpush.msra.mxu0 0.0
    %35 = vmatpush.msra.mxu0 0.0
    %36 = vmatpush.msra.mxu0 0.0
    %37 = vmatpush.msra.mxu0 0.0
    %38 = vmatpush.msra.mxu0 0.0
    %39 = vmatpush.msra.mxu0 0.0
    %40 = vmatpush.msra.mxu0 0.0
    %41 = vmatpush.msra.mxu0 0.0
    %42 = vmatpush.msra.mxu0 0.0
    %43 = vmatpush.msra.mxu0 0.0
    %44 = vmatpush.msra.mxu0 0.0
    %45 = vmatpush.msra.mxu0 0.0
    %46 = vmatpush.msra.mxu0 %v21
    %47 = vmatmul.f32.gmra.mxu0 %v29
    %v48 = vpop.f32.mrf.mxu0
    %v49 = vadd.f32 %v25, %v48
    %50 = vdwg.mxu0
    %51 = vst [vmem:[#allocation2] sm:$0xff] %v49
    %s52 = scalar_lea.vmem %s1, 8
    %v53 = vld [vmem:[%s52] sm:$0xff]
    %v55 = vsel %vm27, %v53, 0
    %57 = vmatpush.msra.mxu0 0.0
    %58 = vmatpush.msra.mxu0 0.0
    %59 = vmatpush.msra.mxu0 0.0
    %60 = vmatpush.msra.mxu0 0.0
    %61 = vmatpush.msra.mxu0 0.0
    %62 = vmatpush.msra.mxu0 0.0
    %63 = vmatpush.msra.mxu0 0.0
    %64 = vmatpush.msra.mxu0 0.0
    %65 = vmatpush.msra.mxu0 0.0
    %66 = vmatpush.msra.mxu0 0.0
    %67 = vmatpush.msra.mxu0 0.0
    %68 = vmatpush.msra.mxu0 0.0
    %69 = vmatpush.msra.mxu0 0.0
    %70 = vmatpush.msra.mxu0 0.0
    %71 = vmatpush.msra.mxu0 0.0
    %72 = vmatpush.msra.mxu0 %v21
    %73 = vmatmul.f32.gmra.mxu0 %v55
    %v74 = vpop.f32.mrf.mxu0
    %v75 = vadd.f32 %v25, %v74
    %76 = vdwg.mxu0
    %s77 = scalar_lea.vmem [#allocation2], 8
    %78 = vst [vmem:[%s77] sm:$0xff] %v75
    %s79 = scalar_lea.vmem %s1, 16
    %v80 = vld [vmem:[%s79] sm:$0xff]
    %v82 = vsel %vm27, %v80, 0
    %84 = vmatpush.msra.mxu0 0.0
    %85 = vmatpush.msra.mxu0 0.0
    %86 = vmatpush.msra.mxu0 0.0
    %87 = vmatpush.msra.mxu0 0.0
    %88 = vmatpush.msra.mxu0 0.0
    %89 = vmatpush.msra.mxu0 0.0
    %90 = vmatpush.msra.mxu0 0.0
    %91 = vmatpush.msra.mxu0 0.0
    %92 = vmatpush.msra.mxu0 0.0
    %93 = vmatpush.msra.mxu0 0.0
    %94 = vmatpush.msra.mxu0 0.0
    %95 = vmatpush.msra.mxu0 0.0
    %96 = vmatpush.msra.mxu0 0.0
    %97 = vmatpush.msra.mxu0 0.0
    %98 = vmatpush.msra.mxu0 0.0
    %99 = vmatpush.msra.mxu0 %v21
    %100 = vmatmul.f32.gmra.mxu0 %v82
    %v101 = vpop.f32.mrf.mxu0
    %v102 = vadd.f32 %v25, %v101
    %103 = vdwg.mxu0
    %s104 = scalar_lea.vmem [#allocation2], 16
    %105 = vst [vmem:[%s104] sm:$0xff] %v102
    %s106 = scalar_lea.vmem %s1, 24
    %v107 = vld [vmem:[%s106] sm:$0xff]
    %v109 = vsel %vm27, %v107, 0
    %111 = vmatpush.msra.mxu0 0.0
    %112 = vmatpush.msra.mxu0 0.0
    %113 = vmatpush.msra.mxu0 0.0
    %114 = vmatpush.msra.mxu0 0.0
    %115 = vmatpush.msra.mxu0 0.0
    %116 = vmatpush.msra.mxu0 0.0
    %117 = vmatpush.msra.mxu0 0.0
    %118 = vmatpush.msra.mxu0 0.0
    %119 = vmatpush.msra.mxu0 0.0
    %120 = vmatpush.msra.mxu0 0.0
    %121 = vmatpush.msra.mxu0 0.0
    %122 = vmatpush.msra.mxu0 0.0
    %123 = vmatpush.msra.mxu0 0.0
    %124 = vmatpush.msra.mxu0 0.0
    %125 = vmatpush.msra.mxu0 0.0
    %126 = vmatpush.msra.mxu0 %v21
    %127 = vmatmul.f32.gmra.mxu0 %v109
    %v128 = vpop.f32.mrf.mxu0
    %v129 = vadd.f32 %v25, %v128
    %130 = vdwg.mxu0
    %s131 = scalar_lea.vmem [#allocation2], 24
    %132 = vst [vmem:[%s131] sm:$0xff] %v129
    %s133 = scalar_lea.vmem %s1, 32
    %v134 = vld [vmem:[%s133] sm:$0xff]
    %v136 = vsel %vm27, %v134, 0
    %138 = vmatpush.msra.mxu0 0.0
    %139 = vmatpush.msra.mxu0 0.0
    %140 = vmatpush.msra.mxu0 0.0
    %141 = vmatpush.msra.mxu0 0.0
    %142 = vmatpush.msra.mxu0 0.0
    %143 = vmatpush.msra.mxu0 0.0
    %144 = vmatpush.msra.mxu0 0.0
    %145 = vmatpush.msra.mxu0 0.0
    %146 = vmatpush.msra.mxu0 0.0
    %147 = vmatpush.msra.mxu0 0.0
    %148 = vmatpush.msra.mxu0 0.0
    %149 = vmatpush.msra.mxu0 0.0
    %150 = vmatpush.msra.mxu0 0.0
    %151 = vmatpush.msra.mxu0 0.0
    %152 = vmatpush.msra.mxu0 0.0
    %153 = vmatpush.msra.mxu0 %v21
    %154 = vmatmul.f32.gmra.mxu0 %v136
    %v155 = vpop.f32.mrf.mxu0
    %v156 = vadd.f32 %v25, %v155
    %157 = vdwg.mxu0
    %s158 = scalar_lea.vmem [#allocation2], 32
    %159 = vst [vmem:[%s158] sm:$0xff] %v156
    %s160 = scalar_lea.vmem %s1, 40
    %v161 = vld [vmem:[%s160] sm:$0xff]
    %v163 = vsel %vm27, %v161, 0
    %165 = vmatpush.msra.mxu0 0.0
    %166 = vmatpush.msra.mxu0 0.0
    %167 = vmatpush.msra.mxu0 0.0
    %168 = vmatpush.msra.mxu0 0.0
    %169 = vmatpush.msra.mxu0 0.0
    %170 = vmatpush.msra.mxu0 0.0
    %171 = vmatpush.msra.mxu0 0.0
    %172 = vmatpush.msra.mxu0 0.0
    %173 = vmatpush.msra.mxu0 0.0
    %174 = vmatpush.msra.mxu0 0.0
    %175 = vmatpush.msra.mxu0 0.0
    %176 = vmatpush.msra.mxu0 0.0
    %177 = vmatpush.msra.mxu0 0.0
    %178 = vmatpush.msra.mxu0 0.0
    %179 = vmatpush.msra.mxu0 0.0
    %180 = vmatpush.msra.mxu0 %v21
    %181 = vmatmul.f32.gmra.mxu0 %v163
    %v182 = vpop.f32.mrf.mxu0
    %v183 = vadd.f32 %v25, %v182
    %184 = vdwg.mxu0
    %s185 = scalar_lea.vmem [#allocation2], 40
    %186 = vst [vmem:[%s185] sm:$0xff] %v183
    %s187 = scalar_lea.vmem %s1, 48
    %v188 = vld [vmem:[%s187] sm:$0xff]
    %v190 = vsel %vm27, %v188, 0
    %192 = vmatpush.msra.mxu0 0.0
    %193 = vmatpush.msra.mxu0 0.0
    %194 = vmatpush.msra.mxu0 0.0
    %195 = vmatpush.msra.mxu0 0.0
    %196 = vmatpush.msra.mxu0 0.0
    %197 = vmatpush.msra.mxu0 0.0
    %198 = vmatpush.msra.mxu0 0.0
    %199 = vmatpush.msra.mxu0 0.0
    %200 = vmatpush.msra.mxu0 0.0
    %201 = vmatpush.msra.mxu0 0.0
    %202 = vmatpush.msra.mxu0 0.0
    %203 = vmatpush.msra.mxu0 0.0
    %204 = vmatpush.msra.mxu0 0.0
    %205 = vmatpush.msra.mxu0 0.0
    %206 = vmatpush.msra.mxu0 0.0
    %207 = vmatpush.msra.mxu0 %v21
    %208 = vmatmul.f32.gmra.mxu0 %v190
    %v209 = vpop.f32.mrf.mxu0
    %v210 = vadd.f32 %v25, %v209
    %211 = vdwg.mxu0
    %s212 = scalar_lea.vmem [#allocation2], 48
    %213 = vst [vmem:[%s212] sm:$0xff] %v210
    %s214 = scalar_lea.vmem %s1, 56
    %v215 = vld [vmem:[%s214] sm:$0xff]
    %v217 = vsel %vm27, %v215, 0
    %219 = vmatpush.msra.mxu0 0.0
    %220 = vmatpush.msra.mxu0 0.0
    %221 = vmatpush.msra.mxu0 0.0
    %222 = vmatpush.msra.mxu0 0.0
    %223 = vmatpush.msra.mxu0 0.0
    %224 = vmatpush.msra.mxu0 0.0
    %225 = vmatpush.msra.mxu0 0.0
    %226 = vmatpush.msra.mxu0 0.0
    %227 = vmatpush.msra.mxu0 0.0
    %228 = vmatpush.msra.mxu0 0.0
    %229 = vmatpush.msra.mxu0 0.0
    %230 = vmatpush.msra.mxu0 0.0
    %231 = vmatpush.msra.mxu0 0.0
    %232 = vmatpush.msra.mxu0 0.0
    %233 = vmatpush.msra.mxu0 0.0
    %234 = vmatpush.msra.mxu0 %v21
    %235 = vmatmul.f32.gmra.mxu0 %v217
    %v236 = vpop.f32.mrf.mxu0
    %v237 = vadd.f32 %v25, %v236
    %238 = vdwg.mxu0
    %s239 = scalar_lea.vmem [#allocation2], 56
    %240 = vst [vmem:[%s239] sm:$0xff] %v237
    %v241 = vld [vmem:[%s3] sm:$0xff]
    %v242 = vld [vmem:[%s3 + $0x8] sm:$0xff]
    %v243 = vld [vmem:[%s3 + $0x10] sm:$0xff]
    %v244 = vld [vmem:[%s3 + $0x18] sm:$0xff]
    %v245 = vld [vmem:[%s0] sm:$0xff]
    %246 = vset.pattern.permute.xlu0 0
    %247 = vperm.xlu0 %246, %v245
    %v248 = vpop.permute.xlu0 %247
    %v249 = vlaneseq
    %v250 = vand.u32 %v249, 127
    %vm251 = vcmp.ge.s32.totalorder %v250, 64
    %vm252 = vcmp.lt.s32.totalorder %v250, 96
    %vm253 = vmand %vm251, %vm252
    %v254 = vsel %vm253, 1.0, 0.5
    %v255 = vsel %vm253, 0.0, 0.5
    %v256 = vld [vmem:[#allocation2] sm:$0xff]
    %vm257 = vcmask 261120
    %v259 = vsel %vm257, 0.0, 0
    %261 = vmatpush.msra.mxu0 0.0
    %262 = vmatpush.msra.mxu0 0.0
    %263 = vmatpush.msra.mxu0 0.0
    %264 = vmatpush.msra.mxu0 0.0
    %265 = vmatpush.msra.mxu0 0.0
    %266 = vmatpush.msra.mxu0 0.0
    %267 = vmatpush.msra.mxu0 0.0
    %268 = vmatpush.msra.mxu0 0.0
    %269 = vmatpush.msra.mxu0 0.0
    %270 = vmatpush.msra.mxu0 0.0
    %271 = vmatpush.msra.mxu0 0.0
    %272 = vmatpush.msra.mxu0 0.0
    %273 = vmatpush.msra.mxu0 %v244
    %274 = vmatpush.msra.mxu0 %v243
    %275 = vmatpush.msra.mxu0 %v242
    %276 = vmatpush.msra.mxu0 %v241
    %277 = vmatmul.f32.gmra.mxu0 %v259
    %v278 = vpop.f32.mrf.mxu0
    %v279 = vadd.f32 0.0, %v278
    %280 = vdwg.mxu0
    %v281 = vadd.f32 %v256, %v279
    %v282 = vtanh.pop %v281
    %v283 = vmul.f32 %v254, %v282
    %v284 = vadd.f32 %v283, %v255
    %v285 = vmul.f32 %v284, 0.0
    %287 = vrot.lane.b32.xlu0 %v284, 64
    %v288 = vpop.permute.xlu0 %287
    %v290 = vmul.f32 %v284, %v288
    %292 = vrot.lane.b32.xlu0 %v290, 32
    %v293 = vpop.permute.xlu0 %292
    %v295 = vadd.f32 %v285, %v293
    %v296 = vtanh.pop %v295
    %298 = vrot.lane.b32.xlu0 %v296, 64
    %v299 = vpop.permute.xlu0 %298
    %v301 = vmul.f32 %v284, %v299
    %vm302 = vcmp.le.s32.totalorder %v248, 0
    %v303 = vsel %vm302, %v301, 0.0
    %v304 = vsel %vm302, %v295, 0.0
    %v305 = vld [vmem:[%s77] sm:$0xff]
    %307 = vrot.lane.b32.xlu0 %v303, 32
    %v308 = vpop.permute.xlu0 %307
    %v309 = vsel %vm257, %v308, 0
    %311 = vmatpush.msra.mxu0 0.0
    %312 = vmatpush.msra.mxu0 0.0
    %313 = vmatpush.msra.mxu0 0.0
    %314 = vmatpush.msra.mxu0 0.0
    %315 = vmatpush.msra.mxu0 0.0
    %316 = vmatpush.msra.mxu0 0.0
    %317 = vmatpush.msra.mxu0 0.0
    %318 = vmatpush.msra.mxu0 0.0
    %319 = vmatpush.msra.mxu0 0.0
    %320 = vmatpush.msra.mxu0 0.0
    %321 = vmatpush.msra.mxu0 0.0
    %322 = vmatpush.msra.mxu0 0.0
    %323 = vmatpush.msra.mxu0 %v244
    %324 = vmatpush.msra.mxu0 %v243
    %325 = vmatpush.msra.mxu0 %v242
    %326 = vmatpush.msra.mxu0 %v241
    %327 = vmatmul.f32.gmra.mxu0 %v309
    %v328 = vpop.f32.mrf.mxu0
    %v329 = vadd.f32 0.0, %v328
    %330 = vdwg.mxu0
    %v331 = vadd.f32 %v305, %v329
    %v332 = vtanh.pop %v331
    %v333 = vmul.f32 %v254, %v332
    %v334 = vadd.f32 %v333, %v255
    %v335 = vmul.f32 %v334, %v304
    %337 = vrot.lane.b32.xlu0 %v334, 64
    %v338 = vpop.permute.xlu0 %337
    %v340 = vmul.f32 %v334, %v338
    %342 = vrot.lane.b32.xlu0 %v340, 32
    %v343 = vpop.permute.xlu0 %342
    %v345 = vadd.f32 %v335, %v343
    %v346 = vtanh.pop %v345
    %348 = vrot.lane.b32.xlu0 %v346, 64
    %v349 = vpop.permute.xlu0 %348
    %v351 = vmul.f32 %v334, %v349
    %vm352 = vcmp.le.s32.totalorder %v248, 1
    %v353 = vsel %vm352, %v351, %v303
    %v354 = vsel %vm352, %v345, %v304
    %v355 = vld [vmem:[%s104] sm:$0xff]
    %357 = vrot.lane.b32.xlu0 %v353, 32
    %v358 = vpop.permute.xlu0 %357
    %v359 = vsel %vm257, %v358, 0
    %361 = vmatpush.msra.mxu0 0.0
    %362 = vmatpush.msra.mxu0 0.0
    %363 = vmatpush.msra.mxu0 0.0
    %364 = vmatpush.msra.mxu0 0.0
    %365 = vmatpush.msra.mxu0 0.0
    %366 = vmatpush.msra.mxu0 0.0
    %367 = vmatpush.msra.mxu0 0.0
    %368 = vmatpush.msra.mxu0 0.0
    %369 = vmatpush.msra.mxu0 0.0
    %370 = vmatpush.msra.mxu0 0.0
    %371 = vmatpush.msra.mxu0 0.0
    %372 = vmatpush.msra.mxu0 0.0
    %373 = vmatpush.msra.mxu0 %v244
    %374 = vmatpush.msra.mxu0 %v243
    %375 = vmatpush.msra.mxu0 %v242
    %376 = vmatpush.msra.mxu0 %v241
    %377 = vmatmul.f32.gmra.mxu0 %v359
    %v378 = vpop.f32.mrf.mxu0
    %v379 = vadd.f32 0.0, %v378
    %380 = vdwg.mxu0
    %v381 = vadd.f32 %v355, %v379
    %v382 = vtanh.pop %v381
    %v383 = vmul.f32 %v254, %v382
    %v384 = vadd.f32 %v383, %v255
    %v385 = vmul.f32 %v384, %v354
    %387 = vrot.lane.b32.xlu0 %v384, 64
    %v388 = vpop.permute.xlu0 %387
    %v390 = vmul.f32 %v384, %v388
    %392 = vrot.lane.b32.xlu0 %v390, 32
    %v393 = vpop.permute.xlu0 %392
    %v395 = vadd.f32 %v385, %v393
    %v396 = vtanh.pop %v395
    %398 = vrot.lane.b32.xlu0 %v396, 64
    %v399 = vpop.permute.xlu0 %398
    %v401 = vmul.f32 %v384, %v399
    %vm402 = vcmp.le.s32.totalorder %v248, 2
    %v403 = vsel %vm402, %v401, %v353
    %v404 = vsel %vm402, %v395, %v354
    %v405 = vld [vmem:[%s131] sm:$0xff]
    %407 = vrot.lane.b32.xlu0 %v403, 32
    %v408 = vpop.permute.xlu0 %407
    %v409 = vsel %vm257, %v408, 0
    %411 = vmatpush.msra.mxu0 0.0
    %412 = vmatpush.msra.mxu0 0.0
    %413 = vmatpush.msra.mxu0 0.0
    %414 = vmatpush.msra.mxu0 0.0
    %415 = vmatpush.msra.mxu0 0.0
    %416 = vmatpush.msra.mxu0 0.0
    %417 = vmatpush.msra.mxu0 0.0
    %418 = vmatpush.msra.mxu0 0.0
    %419 = vmatpush.msra.mxu0 0.0
    %420 = vmatpush.msra.mxu0 0.0
    %421 = vmatpush.msra.mxu0 0.0
    %422 = vmatpush.msra.mxu0 0.0
    %423 = vmatpush.msra.mxu0 %v244
    %424 = vmatpush.msra.mxu0 %v243
    %425 = vmatpush.msra.mxu0 %v242
    %426 = vmatpush.msra.mxu0 %v241
    %427 = vmatmul.f32.gmra.mxu0 %v409
    %v428 = vpop.f32.mrf.mxu0
    %v429 = vadd.f32 0.0, %v428
    %430 = vdwg.mxu0
    %v431 = vadd.f32 %v405, %v429
    %v432 = vtanh.pop %v431
    %v433 = vmul.f32 %v254, %v432
    %v434 = vadd.f32 %v433, %v255
    %v435 = vmul.f32 %v434, %v404
    %437 = vrot.lane.b32.xlu0 %v434, 64
    %v438 = vpop.permute.xlu0 %437
    %v440 = vmul.f32 %v434, %v438
    %442 = vrot.lane.b32.xlu0 %v440, 32
    %v443 = vpop.permute.xlu0 %442
    %v445 = vadd.f32 %v435, %v443
    %v446 = vtanh.pop %v445
    %448 = vrot.lane.b32.xlu0 %v446, 64
    %v449 = vpop.permute.xlu0 %448
    %v451 = vmul.f32 %v434, %v449
    %vm452 = vcmp.le.s32.totalorder %v248, 3
    %v453 = vsel %vm452, %v451, %v403
    %v454 = vsel %vm452, %v445, %v404
    %v455 = vld [vmem:[%s158] sm:$0xff]
    %457 = vrot.lane.b32.xlu0 %v453, 32
    %v458 = vpop.permute.xlu0 %457
    %v459 = vsel %vm257, %v458, 0
    %461 = vmatpush.msra.mxu0 0.0
    %462 = vmatpush.msra.mxu0 0.0
    %463 = vmatpush.msra.mxu0 0.0
    %464 = vmatpush.msra.mxu0 0.0
    %465 = vmatpush.msra.mxu0 0.0
    %466 = vmatpush.msra.mxu0 0.0
    %467 = vmatpush.msra.mxu0 0.0
    %468 = vmatpush.msra.mxu0 0.0
    %469 = vmatpush.msra.mxu0 0.0
    %470 = vmatpush.msra.mxu0 0.0
    %471 = vmatpush.msra.mxu0 0.0
    %472 = vmatpush.msra.mxu0 0.0
    %473 = vmatpush.msra.mxu0 %v244
    %474 = vmatpush.msra.mxu0 %v243
    %475 = vmatpush.msra.mxu0 %v242
    %476 = vmatpush.msra.mxu0 %v241
    %477 = vmatmul.f32.gmra.mxu0 %v459
    %v478 = vpop.f32.mrf.mxu0
    %v479 = vadd.f32 0.0, %v478
    %480 = vdwg.mxu0
    %v481 = vadd.f32 %v455, %v479
    %v482 = vtanh.pop %v481
    %v483 = vmul.f32 %v254, %v482
    %v484 = vadd.f32 %v483, %v255
    %v485 = vmul.f32 %v484, %v454
    %487 = vrot.lane.b32.xlu0 %v484, 64
    %v488 = vpop.permute.xlu0 %487
    %v490 = vmul.f32 %v484, %v488
    %492 = vrot.lane.b32.xlu0 %v490, 32
    %v493 = vpop.permute.xlu0 %492
    %v495 = vadd.f32 %v485, %v493
    %v496 = vtanh.pop %v495
    %498 = vrot.lane.b32.xlu0 %v496, 64
    %v499 = vpop.permute.xlu0 %498
    %v501 = vmul.f32 %v484, %v499
    %vm502 = vcmp.le.s32.totalorder %v248, 4
    %v503 = vsel %vm502, %v501, %v453
    %v504 = vsel %vm502, %v495, %v454
    %v505 = vld [vmem:[%s185] sm:$0xff]
    %507 = vrot.lane.b32.xlu0 %v503, 32
    %v508 = vpop.permute.xlu0 %507
    %v509 = vsel %vm257, %v508, 0
    %511 = vmatpush.msra.mxu0 0.0
    %512 = vmatpush.msra.mxu0 0.0
    %513 = vmatpush.msra.mxu0 0.0
    %514 = vmatpush.msra.mxu0 0.0
    %515 = vmatpush.msra.mxu0 0.0
    %516 = vmatpush.msra.mxu0 0.0
    %517 = vmatpush.msra.mxu0 0.0
    %518 = vmatpush.msra.mxu0 0.0
    %519 = vmatpush.msra.mxu0 0.0
    %520 = vmatpush.msra.mxu0 0.0
    %521 = vmatpush.msra.mxu0 0.0
    %522 = vmatpush.msra.mxu0 0.0
    %523 = vmatpush.msra.mxu0 %v244
    %524 = vmatpush.msra.mxu0 %v243
    %525 = vmatpush.msra.mxu0 %v242
    %526 = vmatpush.msra.mxu0 %v241
    %527 = vmatmul.f32.gmra.mxu0 %v509
    %v528 = vpop.f32.mrf.mxu0
    %v529 = vadd.f32 0.0, %v528
    %530 = vdwg.mxu0
    %v531 = vadd.f32 %v505, %v529
    %v532 = vtanh.pop %v531
    %v533 = vmul.f32 %v254, %v532
    %v534 = vadd.f32 %v533, %v255
    %v535 = vmul.f32 %v534, %v504
    %537 = vrot.lane.b32.xlu0 %v534, 64
    %v538 = vpop.permute.xlu0 %537
    %v540 = vmul.f32 %v534, %v538
    %542 = vrot.lane.b32.xlu0 %v540, 32
    %v543 = vpop.permute.xlu0 %542
    %v545 = vadd.f32 %v535, %v543
    %v546 = vtanh.pop %v545
    %548 = vrot.lane.b32.xlu0 %v546, 64
    %v549 = vpop.permute.xlu0 %548
    %v551 = vmul.f32 %v534, %v549
    %vm552 = vcmp.le.s32.totalorder %v248, 5
    %v553 = vsel %vm552, %v551, %v503
    %v554 = vsel %vm552, %v545, %v504
    %v555 = vld [vmem:[%s212] sm:$0xff]
    %557 = vrot.lane.b32.xlu0 %v553, 32
    %v558 = vpop.permute.xlu0 %557
    %v559 = vsel %vm257, %v558, 0
    %561 = vmatpush.msra.mxu0 0.0
    %562 = vmatpush.msra.mxu0 0.0
    %563 = vmatpush.msra.mxu0 0.0
    %564 = vmatpush.msra.mxu0 0.0
    %565 = vmatpush.msra.mxu0 0.0
    %566 = vmatpush.msra.mxu0 0.0
    %567 = vmatpush.msra.mxu0 0.0
    %568 = vmatpush.msra.mxu0 0.0
    %569 = vmatpush.msra.mxu0 0.0
    %570 = vmatpush.msra.mxu0 0.0
    %571 = vmatpush.msra.mxu0 0.0
    %572 = vmatpush.msra.mxu0 0.0
    %573 = vmatpush.msra.mxu0 %v244
    %574 = vmatpush.msra.mxu0 %v243
    %575 = vmatpush.msra.mxu0 %v242
    %576 = vmatpush.msra.mxu0 %v241
    %577 = vmatmul.f32.gmra.mxu0 %v559
    %v578 = vpop.f32.mrf.mxu0
    %v579 = vadd.f32 0.0, %v578
    %580 = vdwg.mxu0
    %v581 = vadd.f32 %v555, %v579
    %v582 = vtanh.pop %v581
    %v583 = vmul.f32 %v254, %v582
    %v584 = vadd.f32 %v583, %v255
    %v585 = vmul.f32 %v584, %v554
    %587 = vrot.lane.b32.xlu0 %v584, 64
    %v588 = vpop.permute.xlu0 %587
    %v590 = vmul.f32 %v584, %v588
    %592 = vrot.lane.b32.xlu0 %v590, 32
    %v593 = vpop.permute.xlu0 %592
    %v595 = vadd.f32 %v585, %v593
    %v596 = vtanh.pop %v595
    %598 = vrot.lane.b32.xlu0 %v596, 64
    %v599 = vpop.permute.xlu0 %598
    %v601 = vmul.f32 %v584, %v599
    %vm602 = vcmp.le.s32.totalorder %v248, 6
    %v603 = vsel %vm602, %v601, %v553
    %v604 = vsel %vm602, %v595, %v554
    %v605 = vld [vmem:[%s239] sm:$0xff]
    %607 = vrot.lane.b32.xlu0 %v603, 32
    %v608 = vpop.permute.xlu0 %607
    %v609 = vsel %vm257, %v608, 0
    %611 = vmatpush.msra.mxu0 0.0
    %612 = vmatpush.msra.mxu0 0.0
    %613 = vmatpush.msra.mxu0 0.0
    %614 = vmatpush.msra.mxu0 0.0
    %615 = vmatpush.msra.mxu0 0.0
    %616 = vmatpush.msra.mxu0 0.0
    %617 = vmatpush.msra.mxu0 0.0
    %618 = vmatpush.msra.mxu0 0.0
    %619 = vmatpush.msra.mxu0 0.0
    %620 = vmatpush.msra.mxu0 0.0
    %621 = vmatpush.msra.mxu0 0.0
    %622 = vmatpush.msra.mxu0 0.0
    %623 = vmatpush.msra.mxu0 %v244
    %624 = vmatpush.msra.mxu0 %v243
    %625 = vmatpush.msra.mxu0 %v242
    %626 = vmatpush.msra.mxu0 %v241
    %627 = vmatmul.f32.gmra.mxu0 %v609
    %v628 = vpop.f32.mrf.mxu0
    %v629 = vadd.f32 0.0, %v628
    %630 = vdwg.mxu0
    %v631 = vadd.f32 %v605, %v629
    %v632 = vtanh.pop %v631
    %v633 = vmul.f32 %v254, %v632
    %v634 = vadd.f32 %v633, %v255
    %v635 = vmul.f32 %v634, %v604
    %637 = vrot.lane.b32.xlu0 %v634, 64
    %v638 = vpop.permute.xlu0 %637
    %v640 = vmul.f32 %v634, %v638
    %642 = vrot.lane.b32.xlu0 %v640, 32
    %v643 = vpop.permute.xlu0 %642
    %v645 = vadd.f32 %v635, %v643
    %v646 = vtanh.pop %v645
    %648 = vrot.lane.b32.xlu0 %v646, 64
    %v649 = vpop.permute.xlu0 %648
    %v651 = vmul.f32 %v634, %v649
    %vm652 = vcmp.le.s32.totalorder %v248, 7
    %v653 = vsel %vm652, %v651, %v603
    %655 = vrot.lane.b32.xlu0 %v653, 32
    %v656 = vpop.permute.xlu0 %655
    %658 = vst.msk [vmem:[#allocation3] sm:$0xff] %vm257, %v656
    // Predicated region
    $region22: #{node_history_encoder_forward.1} parent=1 // pred_check
      _
    $region23: #{node_history_encoder_forward.1} parent=1 // pred_check_branch
      %660 = sbr.rel (0) target = $region25
    $region24: #{node_history_encoder_forward.1} parent=1 // pred_region
      %662 = vsyncadd [#allocation4], 0
      %s664 = sshll.u32 [#allocation3], 4
      %s665 = int_to_ptr.vmem [resolvable:$true] %s664
      %s666 = sshll.u32 %s5, 4
      %s667 = int_to_ptr.hbm [resolvable:$true] %s666
      %669 = dma.vmem_to_hbm [thread:$0]  %s665, 128, %s667, [#allocation4]
    $region25: #{node_history_encoder_forward.1} parent=1 // pred_fallthru
      _
    // Predicated region
    $region26: #{node_history_encoder_forward.1} parent=1 // pred_check
      _
    $region27: #{node_history_encoder_forward.1} parent=1 // pred_check_branch
      %671 = sbr.rel (0) target = $region29
    $region28: #{node_history_encoder_forward.1} parent=1 // pred_region
      %673 = dma.done [#allocation4], 128
    $region29: #{node_history_encoder_forward.1} parent=1 // pred_fallthru
      _
    %674 = vsyncpa [#allocation4], 1

</llo_original>
